<compile_context>
chip_gen: v6e
topology: v6e:2x2x1
jax: 0.10.0
libtpu: 0.0.40
codegen_flags: <defaults>
</compile_context>

<pallas_src>
import functools

import jax
import jax.numpy as jnp
from jax import lax
from jax.experimental import pallas as pl
from jax.experimental.pallas import tpu as pltpu

_LANES = 128
_SUBLANES = 8


def _round_up(x, m):
    return (x + m - 1) // m * m


def _vmem_block_bytes(shape, itemsize):
    """Rough VMEM bytes of a block ((8,128)-tiled on the last two dims)."""
    if len(shape) < 2:
        return _round_up(int(shape[0]) * itemsize, 4 * _LANES)
    lead = 1
    for d in shape[:-2]:
        lead *= int(d)
    return (lead * _round_up(int(shape[-2]), _SUBLANES)
            * _round_up(int(shape[-1]), _LANES) * itemsize)


def _vmem_limit_bytes():
    """Generation-aware scoped-VMEM limit: ~75% of physical, capped.

    v7x (64 MiB part) -> ~48 MB;  v5e / v6e (128 MiB parts) -> ~96 MB.
    """
    try:
        cap = int(pltpu.get_tpu_info().vmem_capacity_bytes)
    except Exception:
        cap = 64 * 1024 * 1024          # conservative fallback (safe on v7x)
    return max(32 * 1024 * 1024, min(cap * 3 // 4, 100 * 1024 * 1024))


def _constant_block_spec(shape, index_map):
    """Single-buffer a grid-constant block (fall back to default buffering)."""
    try:
        return pl.BlockSpec(shape, index_map, pipeline_mode=pl.Buffered(1))
    except Exception:
        return pl.BlockSpec(shape, index_map)


def _conv_relu_kernel(x_ref, w_ref, b_ref, o_ref, *, taps_h, taps_w, th, wo,
                      fold):
    """Fused conv + bias + ReLU for one (image, output-row-tile) block.

    x_ref: (th + taps_h - 1, ws, cpp)   space-to-depth input window
    w_ref: (taps_h*taps_w*cpp, O_pad)           if fold
           (taps_h*taps_w, cpp, O_pad)          otherwise
    b_ref: (1, O_pad)                   f32 bias (padded lanes are zero)
    o_ref: (th*wo, O_pad)               lane-dense output block
    """
    xv = x_ref[...]
    # One column window per horizontal super-tap.  Only taps_w - 1 of these
    # are sublane-offset slices (vs. up to k*k/2 in the per-tap phase layout).
    # TODO(synk): the dw > 0 offset could be applied with pltpu.roll (XLU)
    # instead of an offset slice to take it off the load/VALU slots.
    cols = [xv[:, dw:dw + wo, :] for dw in range(taps_w)]

    if fold:
        # Single deep contraction: K = taps_h*taps_w*cpp (= k*k*C_in), one
        # MXU result pop and a single f32 accumulator pass.
        pieces = [cols[dw][dh:dh + th] for dh in range(taps_h)
                  for dw in range(taps_w)]              # each (th, wo, cpp)
        lhs = jnp.concatenate(pieces, axis=-1).reshape(th * wo, -1)
        acc = jnp.dot(lhs, w_ref[...], preferred_element_type=jnp.float32)
    else:
        # Deep-C path: each (super-)tap GEMM already has K = s*s*C >= 512.
        acc = None
        for dh in range(taps_h):
            for dw in range(taps_w):
                piece = cols[dw][dh:dh + th].reshape(th * wo, -1)
                part = jnp.dot(piece, w_ref[dh * taps_w + dw],
                               preferred_element_type=jnp.float32)
                acc = part if acc is None else acc + part

    acc = acc + b_ref[...]                              # f32 bias add
    o_ref[...] = jnp.maximum(acc, 0.0).astype(o_ref.dtype)   # ReLU, store


def convolution_block_nhwc(x_nhwc, weight, bias, *, kernel_size=4, stride=2,
                           padding=1, compute_dtype=jnp.bfloat16,
                           out_dtype=None, fold_taps=None, target_rows=512):
    """ConvolutionBlock forward (conv + bias + ReLU), channels-last in / out.

    compute_dtype: MXU operand dtype.  bf16 (default) halves HBM traffic and
      hits peak MXU rate; pass jnp.float32 for strict parity with the PyTorch
      module (accumulation, bias and ReLU are always f32 either way).
    out_dtype: storage dtype of the result (default: compute_dtype).
    fold_taps: fold all k*k taps into one deep MXU contraction (default: only
      when C_in < 128, where per-tap GEMMs would starve the MXU).
    """
    N, H, W, C = x_nhwc.shape
    O = weight.shape[0]
    k, s, p = kernel_size, stride, padding
    if out_dtype is None:
        out_dtype = compute_dtype
    if fold_taps is None:
        fold_taps = C < 128

    Ho = (H + 2 * p - k) // s + 1
    Wo = (W + 2 * p - k) // s + 1
    taps_h = -(-k // s)                  # super-pixel taps = ceil(k / s)
    taps_w = -(-k // s)
    halo = taps_h - 1
    cpp = s * s * C                      # channels per space-to-depth pixel
    O_pad = _round_up(O, _LANES)
    K_fold = taps_h * taps_w * cpp
    ws_need = Wo + taps_w - 1

    csize = jnp.dtype(compute_dtype).itemsize
    osize = jnp.dtype(out_dtype).itemsize
    vmem_limit = _vmem_limit_bytes()

    # ---- output-row tile: bounded VMEM, >= 4 grid steps even at small N ----
    def step_bytes(t):
        b = 2 * _vmem_block_bytes((t + halo, ws_need, cpp), csize)   # input x2
        b += 2 * _vmem_block_bytes((t * Wo, O_pad), osize)           # out   x2
        b += _vmem_block_bytes((t * Wo, O_pad), 4)                   # f32 acc
        if fold_taps:
            b += _vmem_block_bytes((K_fold, O_pad), csize)           # weights
            b += _vmem_block_bytes((t * Wo, K_fold), csize)          # lhs
        else:
            b += _vmem_block_bytes((taps_h * taps_w, cpp, O_pad), csize)
        return b

    th = min(Ho, max(1, target_rows // max(Wo, 1)))
    while th > 1 and step_bytes(th) > vmem_limit // 2:
        th = (th + 1) // 2
    while th > 1 and N * pl.cdiv(Ho, th) < 4:
        th = (th + 1) // 2
    n_t = pl.cdiv(Ho, th)

    # ---- layout prep: one fused XLA pass, no im2col matrix in HBM ---------
    # Zero-pad so the conv padding is applied and every row tile (incl. the
    # last, possibly partial one) has a full halo window.
    hp_tot = max(_round_up(H + 2 * p, s), (n_t * th + halo) * s)
    wp_tot = max(_round_up(W + 2 * p, s), ws_need * s)
    xp = jnp.pad(x_nhwc, ((0, 0), (p, hp_tot - H - p),
                          (p, wp_tot - W - p), (0, 0)))
    hs_tot, ws_tot = hp_tot // s, wp_tot // s
    # Space-to-depth: super-pixel (hs, ws) holds the s*s*C values of padded
    # pixels [s*hs, s*hs+s) x [s*ws, s*ws+s); the strided conv becomes a
    # stride-1 taps_h x taps_w conv over cpp channels (deep, lane-friendly K).
    x_sd = (xp.reshape(N, hs_tot, s, ws_tot, s, C)
              .transpose(0, 1, 3, 2, 4, 5)
              .reshape(N, hs_tot, ws_tot, cpp)[:, :, :ws_need]
              .astype(compute_dtype))
    # Row tiles with a halo of (taps_h - 1) super-rows (tiny duplication).
    x_tiles = jnp.stack([x_sd[:, t * th:t * th + th + halo]
                         for t in range(n_t)], axis=1)
    # x_tiles: (N, n_t, th + halo, ws_need, cpp)

    # Filters: OIHW -> (dh, dw, i, j, C, O_pad) with kh = s*dh + i,
    # kw = s*dw + j; C_out zero-padded to 128 lanes (lane-dense MXU / stores).
    w6 = jnp.pad(weight, ((0, 0), (0, 0), (0, taps_h * s - k),
                          (0, taps_w * s - k)))
    w6 = w6.reshape(O, C, taps_h, s, taps_w, s).transpose(2, 4, 3, 5, 1, 0)
    w6 = jnp.pad(w6, ((0, 0),) * 5 + ((0, O_pad - O),)).astype(compute_dtype)
    if fold_taps:
        wmat = w6.reshape(K_fold, O_pad)
        w_spec = _constant_block_spec((K_fold, O_pad), lambda n, t: (0, 0))
    else:
        wmat = w6.reshape(taps_h * taps_w, cpp, O_pad)
        w_spec = _constant_block_spec((taps_h * taps_w, cpp, O_pad),
                                      lambda n, t: (0, 0, 0))
    b2 = jnp.pad(bias, (0, O_pad - O)).astype(jnp.float32).reshape(1, O_pad)
    b_spec = _constant_block_spec((1, O_pad), lambda n, t: (0, 0))

    kernel = functools.partial(_conv_relu_kernel, taps_h=taps_h,
                               taps_w=taps_w, th=th, wo=Wo, fold=fold_taps)

    cost = pl.CostEstimate(
        flops=2 * N * n_t * th * Wo * K_fold * O_pad,
        transcendentals=0,
        bytes_accessed=(x_tiles.size * csize + wmat.size * csize
                        + b2.size * 4 + N * n_t * th * Wo * O_pad * osize))

    out = pl.pallas_call(
        kernel,
        out_shape=jax.ShapeDtypeStruct((N, n_t, th * Wo, O_pad), out_dtype),
        grid_spec=pltpu.PrefetchScalarGridSpec(
            num_scalar_prefetch=0,
            grid=(N, n_t),
            in_specs=[
                pl.BlockSpec((None, None, th + halo, ws_need, cpp),
                             lambda n, t: (n, t, 0, 0, 0)),
                w_spec,
                b_spec,
            ],
            out_specs=pl.BlockSpec((None, None, th * Wo, O_pad),
                                   lambda n, t: (n, t, 0, 0)),
        ),
        compiler_params=pltpu.CompilerParams(
            dimension_semantics=("parallel", "parallel"),
            vmem_limit_bytes=vmem_limit),
        cost_estimate=cost,
    )(x_tiles, wmat, b2)

    # Drop the row / lane padding; stay channels-last at the block boundary.
    out = out.reshape(N, n_t * th, Wo, O_pad)
    return out[:, :Ho, :, :O]


def convolution_block(x, weight, bias, **kwargs):
    """PyTorch-parity entry point: NCHW in, NCHW out.

    In a full model you would keep NHWC between blocks and drop these two
    transposes (they exist only to match the nn.Module's NCHW convention).
    """
    y = convolution_block_nhwc(jnp.transpose(x, (0, 2, 3, 1)), weight, bias,
                               **kwargs)
    return jnp.transpose(y, (0, 3, 1, 2))


def _reference(x, weight, bias, *, stride=2, padding=1,
               compute_dtype=jnp.float32):
    """XLA reference: conv in compute_dtype operands, f32 accumulation."""
    y = lax.conv_general_dilated(
        x.astype(compute_dtype), weight.astype(compute_dtype),
        window_strides=(stride, stride),
        padding=[(padding, padding), (padding, padding)],
        dimension_numbers=("NCHW", "OIHW", "NCHW"),
        preferred_element_type=jnp.float32)
    y = y + bias[None, :, None, None].astype(jnp.float32)
    return jnp.maximum(y, 0.0)


if __name__ == "__main__":
    key = jax.random.PRNGKey(0)
    k_x, k_w, k_b = jax.random.split(key, 3)

    N, C_in, H, W = 2, 4, 16, 16
    C_out, ksz = 8, 4

    x = jax.random.normal(k_x, (N, C_in, H, W), dtype=jnp.float32)
    weight = 0.1 * jax.random.normal(k_w, (C_out, C_in, ksz, ksz),
                                     dtype=jnp.float32)
    bias = 0.1 * jax.random.normal(k_b, (C_out,), dtype=jnp.float32)

    # 1) Default fast path: bf16 MXU operands, folded taps, bf16 output.
    fwd = jax.jit(convolution_block)
    out = jax.block_until_ready(fwd(x, weight, bias))
    assert out.shape == (N, C_out, H // 2, W // 2), out.shape
    ref = _reference(x, weight, bias, compute_dtype=jnp.bfloat16)
    err = float(jnp.max(jnp.abs(out.astype(jnp.float32) - ref)))
    assert jnp.allclose(out.astype(jnp.float32), ref, atol=3e-2, rtol=3e-2), (
        f"bf16 path mismatch vs reference conv (max abs err {err})")

    # 2) f32 parity option; also exercises the per-(super-)tap deep-C branch.
    fwd32 = jax.jit(functools.partial(convolution_block,
                                      compute_dtype=jnp.float32,
                                      out_dtype=jnp.float32,
                                      fold_taps=False))
    out32 = jax.block_until_ready(fwd32(x, weight, bias))
    ref32 = _reference(x, weight, bias, compute_dtype=jnp.float32)
    err32 = float(jnp.max(jnp.abs(out32 - ref32)))
    assert jnp.allclose(out32, ref32, atol=2e-2, rtol=2e-2), (
        f"f32 path mismatch vs reference conv (max abs err {err32})")

    print("KERNEL_OK")
</pallas_src>

<mosaic_0001>
module attributes {stable_mosaic.version = 11 : i64} {
  func.func @_conv_relu_kernel(%arg0: i32, %arg1: i32, %arg2: memref<1x1x5x9x16xbf16, #tpu.memory_space<vmem>>, %arg3: memref<64x128xbf16, #tpu.memory_space<vmem>>, %arg4: memref<1x128xf32, #tpu.memory_space<vmem>>, %arg5: memref<1x1x32x128xbf16, #tpu.memory_space<vmem>>) attributes {dimension_semantics = [#tpu.dimension_semantics<parallel>, #tpu.dimension_semantics<parallel>], iteration_bounds = array<i64: 2, 2>, scalar_prefetch = 0 : i64, scratch_operands = 0 : i64, tpu.core_type = #tpu.core_type<tc>, window_params = [{transform_indices = @transform_0, window_bounds = array<i64: 1, 1, 5, 9, 16>}, {pipeline_mode = #tpu.pipeline_mode<synchronous>, transform_indices = @transform_1, window_bounds = array<i64: 64, 128>}, {pipeline_mode = #tpu.pipeline_mode<synchronous>, transform_indices = @transform_2, window_bounds = array<i64: 1, 128>}, {transform_indices = @transform_3, window_bounds = array<i64: 1, 1, 32, 128>}]} {
    %c0 = arith.constant 0 : index
    %c0_0 = arith.constant 0 : index
    %c0_1 = arith.constant 0 : index
    %c0_2 = arith.constant 0 : index
    %c0_3 = arith.constant 0 : index
    %0 = vector.load %arg2[%c0, %c0_0, %c0_1, %c0_2, %c0_3] : memref<1x1x5x9x16xbf16, #tpu.memory_space<vmem>>, vector<1x1x5x9x16xbf16>
    %1 = vector.shape_cast %0 : vector<1x1x5x9x16xbf16> to vector<5x9x16xbf16>
    %2 = vector.extract_strided_slice %1 {offsets = [0, 0, 0], sizes = [5, 8, 16], strides = [1, 1, 1]} : vector<5x9x16xbf16> to vector<5x8x16xbf16>
    %3 = vector.extract_strided_slice %1 {offsets = [0, 1, 0], sizes = [5, 8, 16], strides = [1, 1, 1]} : vector<5x9x16xbf16> to vector<5x8x16xbf16>
    %4 = vector.extract_strided_slice %2 {offsets = [0, 0, 0], sizes = [4, 8, 16], strides = [1, 1, 1]} : vector<5x8x16xbf16> to vector<4x8x16xbf16>
    %5 = vector.extract_strided_slice %3 {offsets = [0, 0, 0], sizes = [4, 8, 16], strides = [1, 1, 1]} : vector<5x8x16xbf16> to vector<4x8x16xbf16>
    %6 = vector.extract_strided_slice %2 {offsets = [1, 0, 0], sizes = [4, 8, 16], strides = [1, 1, 1]} : vector<5x8x16xbf16> to vector<4x8x16xbf16>
    %7 = vector.extract_strided_slice %3 {offsets = [1, 0, 0], sizes = [4, 8, 16], strides = [1, 1, 1]} : vector<5x8x16xbf16> to vector<4x8x16xbf16>
    %8 = tpu.concatenate %4, %5, %6, %7 in 2 : vector<4x8x16xbf16>, vector<4x8x16xbf16>, vector<4x8x16xbf16>, vector<4x8x16xbf16> -> vector<4x8x64xbf16>
    %9 = vector.shape_cast %8 : vector<4x8x64xbf16> to vector<32x64xbf16>
    %c0_4 = arith.constant 0 : index
    %c0_5 = arith.constant 0 : index
    %10 = vector.load %arg3[%c0_4, %c0_5] : memref<64x128xbf16, #tpu.memory_space<vmem>>, vector<64x128xbf16>
    %cst = arith.constant dense<0.000000e+00> : vector<32x128xf32>
    %11 = tpu.matmul %9, %10, %cst {dimension_numbers = #tpu.dot_dimension_numbers<[1], [0], [0], [1], [0, 0, 1, 1], [], []>} : vector<32x64xbf16>, vector<64x128xbf16>, vector<32x128xf32> -> vector<32x128xf32>
    %c0_6 = arith.constant 0 : index
    %c0_7 = arith.constant 0 : index
    %12 = vector.load %arg4[%c0_6, %c0_7] : memref<1x128xf32, #tpu.memory_space<vmem>>, vector<1x128xf32>
    %13 = vector.broadcast %12 : vector<1x128xf32> to vector<32x128xf32>
    %14 = arith.addf %11, %13 : vector<32x128xf32>
    %cst_8 = arith.constant 0.000000e+00 : f32
    %15 = vector.broadcast %cst_8 : f32 to vector<32x128xf32>
    %16 = arith.maximumf %14, %15 : vector<32x128xf32>
    %17 = arith.truncf %16 : vector<32x128xf32> to vector<32x128xbf16>
    %c0_9 = arith.constant 0 : index
    %c0_10 = arith.constant 0 : index
    %c0_11 = arith.constant 0 : index
    %c0_12 = arith.constant 0 : index
    %18 = vector.load %arg5[%c0_9, %c0_10, %c0_11, %c0_12] : memref<1x1x32x128xbf16, #tpu.memory_space<vmem>>, vector<1x1x32x128xbf16>
    %19 = vector.shape_cast %18 : vector<1x1x32x128xbf16> to vector<32x128xbf16>
    %20 = vector.shape_cast %17 : vector<32x128xbf16> to vector<1x1x32x128xbf16>
    tpu.vector_store %arg5[%c0_9, %c0_10, %c0_11, %c0_12], %20 {strides = array<i32>} : memref<1x1x32x128xbf16, #tpu.memory_space<vmem>>, vector<1x1x32x128xbf16>,
    return
  }
  func.func @transform_0(%arg0: i32, %arg1: i32) -> (i32, i32, i32, i32, i32) {
    %c0_i32 = arith.constant 0 : i32
    %c0_i32_0 = arith.constant 0 : i32
    %c0_i32_1 = arith.constant 0 : i32
    %c0_i32_2 = arith.constant 0 : i32
    return %arg0, %arg1, %c0_i32, %c0_i32_0, %c0_i32_1 : i32, i32, i32, i32, i32
  }
  func.func @transform_1(%arg0: i32, %arg1: i32) -> (i32, i32) {
    %c0_i32 = arith.constant 0 : i32
    %c0_i32_0 = arith.constant 0 : i32
    %c0_i32_1 = arith.constant 0 : i32
    return %c0_i32, %c0_i32_0 : i32, i32
  }
  func.func @transform_2(%arg0: i32, %arg1: i32) -> (i32, i32) {
    %c0_i32 = arith.constant 0 : i32
    %c0_i32_0 = arith.constant 0 : i32
    %c0_i32_1 = arith.constant 0 : i32
    return %c0_i32, %c0_i32_0 : i32, i32
  }
  func.func @transform_3(%arg0: i32, %arg1: i32) -> (i32, i32, i32, i32) {
    %c0_i32 = arith.constant 0 : i32
    %c0_i32_0 = arith.constant 0 : i32
    %c0_i32_1 = arith.constant 0 : i32
    return %arg0, %arg1, %c0_i32, %c0_i32_0 : i32, i32, i32, i32
  }
}

</mosaic_0001>

<llo_original>
// kernel: convolution_block.1
$region0: #{convolution_block.1}
  #allocation0 [shape = 'u32[]', space=smem, size = 0x4, offset = 0x4, fixed_abs, tag = 'smem constant byte address 0x4 - core index']
  #allocation1 [shape = 'u32[144,128]{1,0:T(1,128)}', space=vmem, size = 0x12000, scoped, tag = 'internal scratch']
  %s0 = inlined_call_operand.vmem [shape: bf16[2,2,5,9,16], index: 0, kind: input, shape index: {}]
  %s1 = inlined_call_operand.vmem [shape: bf16[64,128], index: 1, kind: input, shape index: {}]
  %s2 = inlined_call_operand.vmem [shape: f32[1,128], index: 2, kind: input, shape index: {}]
  %s3 = inlined_call_operand.vmem [shape: bf16[2,2,32,128], index: 3, kind: output, shape index: {}]
  %s4 = sld [smem:[#allocation0]]
  $region45: #{convolution_block.1} parent=0
    _
  %s6 = ssub.s32 1, %s4
  %s7 = scalar_select 0, %s6, %s4
  loop: start=0, step=1, limit=6
  $region2: #{convolution_block.1} parent=0 // loop_pre_header
    _
  $region3: #{convolution_block.1} parent=0 // loop_header
    %s9 = sphi 0, %s13
    %p10 = scmp.ge.s32.totalorder %s9, 6
    %s16 = sphi 0, %s28
    %s17 = sphi 0, %s24
    %s18 = sphi 0, %s16
    %s19 = sphi 0, %s17
    %s20 = sphi 0, %s18
    %s21 = sphi 0, %s19
    %s33 = sphi 0, %s35
    %s36 = sphi 0, %s33
    %s37 = sphi 0, %s36
    %s53 = sphi 0, %s37
    %s57 = sphi 0, %s57
    %s59 = sphi 0, %s57
    %s60 = sphi 0, %s59
    %s74 = sphi 0, %s60
    %s78 = sphi 0, %s78
    %s80 = sphi 0, %s78
    %s81 = sphi 0, %s80
    %s95 = sphi 0, %s81
    %s103 = sphi 0, %s105
    %s106 = sphi 0, %s103
    %s107 = sphi 0, %s106
    %s123 = sphi 0, %s107
  $region4: #{convolution_block.1} parent=0 // loop_header_branch
    %12 = sbr.rel (%p10) target = $region8
  $region5: #{convolution_block.1} parent=0 // loop_body
    %s14 = ssub.s32 %s9, 1
    %s15 = ssub.s32 %s9, 2
    %s22 = sadd.s32 1, %s17
    %p23 = scmp.ge.s32.totalorder %s22, 2
    %s24 = scalar_select %p23, 0, %s22
    %s25 = sadd.s32 1, %s16
    %s26 = scalar_select %p23, %s25, %s16
    %p27 = scmp.ge.s32.totalorder %s26, 2
    %s28 = scalar_select %p27, 0, %s26
    %s29 = ssub.s32 %s16, %s28
    %s30 = ssub.s32 %s17, %s24
    %s31 = sor.u32 %s29, %s30
    %p32 = scmp.eq.s32.totalorder %s31, 0
    %s34 = sadd.s32 %s33, 1
    %s35 = scalar_select %p32, %s33, %s34
    %p38 = pneg %p32
    %p39 = scmp.eq.s32.totalorder %s9, 3
    %p40 = por %p38, %p39
    %p41 = scmp.ne.s32.totalorder %s33, %s36
    %p42 = scmp.eq.s32.totalorder %s9, 0
    %p43 = por %p41, %p42
    %p44 = scmp.ne.s32.totalorder %s33, %s36
    %p45 = scmp.eq.s32.totalorder %s14, 3
    %p46 = por %p44, %p45
    %p47 = scmp.ne.s32.totalorder %s36, %s37
    %p48 = scmp.eq.s32.totalorder %s14, 0
    %p49 = por %p47, %p48
    %p50 = scmp.ne.s32.totalorder %s36, %s37
    %p51 = scmp.eq.s32.totalorder %s15, 3
    %p52 = por %p50, %p51
    %p54 = scmp.ne.s32.totalorder %s37, %s53
    %p55 = scmp.eq.s32.totalorder %s15, 0
    %p56 = por %p54, %p55
    %s58 = sadd.s32 %s57, 1
    %p61 = scmp.eq.s32.totalorder %s9, 3
    %p62 = scmp.ne.s32.totalorder %s57, %s59
    %p63 = scmp.eq.s32.totalorder %s9, 0
    %p64 = por %p62, %p63
    %p65 = scmp.ne.s32.totalorder %s57, %s59
    %p66 = scmp.eq.s32.totalorder %s14, 3
    %p67 = por %p65, %p66
    %p68 = scmp.ne.s32.totalorder %s59, %s60
    %p69 = scmp.eq.s32.totalorder %s14, 0
    %p70 = por %p68, %p69
    %p71 = scmp.ne.s32.totalorder %s59, %s60
    %p72 = scmp.eq.s32.totalorder %s15, 3
    %p73 = por %p71, %p72
    %p75 = scmp.ne.s32.totalorder %s60, %s74
    %p76 = scmp.eq.s32.totalorder %s15, 0
    %p77 = por %p75, %p76
    %s79 = sadd.s32 %s78, 1
    %p82 = scmp.eq.s32.totalorder %s9, 3
    %p83 = scmp.ne.s32.totalorder %s78, %s80
    %p84 = scmp.eq.s32.totalorder %s9, 0
    %p85 = por %p83, %p84
    %p86 = scmp.ne.s32.totalorder %s78, %s80
    %p87 = scmp.eq.s32.totalorder %s14, 3
    %p88 = por %p86, %p87
    %p89 = scmp.ne.s32.totalorder %s80, %s81
    %p90 = scmp.eq.s32.totalorder %s14, 0
    %p91 = por %p89, %p90
    %p92 = scmp.ne.s32.totalorder %s80, %s81
    %p93 = scmp.eq.s32.totalorder %s15, 3
    %p94 = por %p92, %p93
    %p96 = scmp.ne.s32.totalorder %s81, %s95
    %p97 = scmp.eq.s32.totalorder %s15, 0
    %p98 = por %p96, %p97
    %s99 = ssub.s32 %s16, %s28
    %s100 = ssub.s32 %s17, %s24
    %s101 = sor.u32 %s99, %s100
    %p102 = scmp.eq.s32.totalorder %s101, 0
    %s104 = sadd.s32 %s103, 1
    %s105 = scalar_select %p102, %s103, %s104
    %p108 = pneg %p102
    %p109 = scmp.eq.s32.totalorder %s9, 3
    %p110 = por %p108, %p109
    %p111 = scmp.ne.s32.totalorder %s103, %s106
    %p112 = scmp.eq.s32.totalorder %s9, 0
    %p113 = por %p111, %p112
    %p114 = scmp.ne.s32.totalorder %s103, %s106
    %p115 = scmp.eq.s32.totalorder %s14, 3
    %p116 = por %p114, %p115
    %p117 = scmp.ne.s32.totalorder %s106, %s107
    %p118 = scmp.eq.s32.totalorder %s14, 0
    %p119 = por %p117, %p118
    %p120 = scmp.ne.s32.totalorder %s106, %s107
    %p121 = scmp.eq.s32.totalorder %s15, 3
    %p122 = por %p120, %p121
    %p124 = scmp.ne.s32.totalorder %s107, %s123
    %p125 = scmp.eq.s32.totalorder %s15, 0
    %p126 = por %p124, %p125
    %p127 = scmp.le.s32.totalorder 1, %s9
    %p128 = scmp.lt.s32.totalorder %s9, 5
    %p129 = pnand %p127, %p128
    %p130 = pneg %p129
    // Predicated region
    $region9: #{convolution_block.1} parent=5 // pred_check
      _
    $region10: #{convolution_block.1} parent=5 // pred_check_branch
      %132 = sbr.rel (%p129) target = $region12
    $region11: #{convolution_block.1} parent=5 // pred_region
      %s133 = ssub.s32 %s9, 1
      // Predicated region
      $region13: #{convolution_block.1} parent=11 // pred_check
        %p134 = pneg %p70
      $region14: #{convolution_block.1} parent=11 // pred_check_branch
        %136 = sbr.rel (%p134) target = $region16
      $region15: #{convolution_block.1} parent=11 // pred_region
        _
      $region16: #{convolution_block.1} parent=11 // pred_fallthru
        _
      // Predicated region
      $region17: #{convolution_block.1} parent=11 // pred_check
        %p137 = pneg %p91
      $region18: #{convolution_block.1} parent=11 // pred_check_branch
        %139 = sbr.rel (%p137) target = $region20
      $region19: #{convolution_block.1} parent=11 // pred_region
        _
      $region20: #{convolution_block.1} parent=11 // pred_fallthru
        _
    $region12: #{convolution_block.1} parent=5 // pred_fallthru
      _
    %p140 = scmp.lt.s32.totalorder %s9, 4
    // Predicated region
    $region21: #{convolution_block.1} parent=5 // pred_check
      %p141 = pneg %p140
    $region22: #{convolution_block.1} parent=5 // pred_check_branch
      %143 = sbr.rel (%p141) target = $region24
    $region23: #{convolution_block.1} parent=5 // pred_region
      // Predicated region
      $region25: #{convolution_block.1} parent=23 // pred_check
        %p144 = pneg %p43
      $region26: #{convolution_block.1} parent=23 // pred_check_branch
        %146 = sbr.rel (%p144) target = $region28
      $region27: #{convolution_block.1} parent=23 // pred_region
        %p147 = scmp.lt.s32.totalorder %s16, 1
        %s148 = scalar_select %p147, %s16, 1
        %p149 = scmp.lt.s32.totalorder %s17, 1
        %s150 = scalar_select %p149, %s17, 1
        %s151 = smul.addr %s150, 10
        %s152 = smul.addr %s148, 20
        %s153 = sadd.s32 %s151, %s152
        %s154 = smul.addr %s153, 4
        %s155 = scalar_lea.vmem %s0, %s154
      $region28: #{convolution_block.1} parent=23 // pred_fallthru
        _
    $region24: #{convolution_block.1} parent=5 // pred_fallthru
      _
    %p156 = scmp.le.s32.totalorder 1, %s9
    %p157 = scmp.lt.s32.totalorder %s9, 5
    %p158 = pnand %p156, %p157
    %p159 = pneg %p158
    // Predicated region
    $region29: #{convolution_block.1} parent=5 // pred_check
      _
    $region30: #{convolution_block.1} parent=5 // pred_check_branch
      %161 = sbr.rel (%p158) target = $region32
    $region31: #{convolution_block.1} parent=5 // pred_region
      %s162 = ssub.s32 %s9, 1
      %p163 = scmp.lt.s32.totalorder %s18, 1
      %s164 = scalar_select %p163, %s18, 1
      %p165 = scmp.lt.s32.totalorder %s19, 1
      %s166 = scalar_select %p165, %s19, 1
      %s167 = smul.addr %s166, 10
      %s168 = smul.addr %s164, 20
      %s169 = sadd.s32 %s167, %s168
      %s170 = smul.addr %s169, 4
      %s171 = scalar_lea.vmem %s0, %s170
      %p172 = pneg %p49
      %p173 = pneg %p46
      %p174 = pneg %p70
      %p175 = pneg %p67
      %p176 = pneg %p91
      %p177 = pneg %p88
      %p178 = pneg %p119
      %p179 = pneg %p116
      %p180 = scmp.lt.s32.totalorder %s18, 1
      %s181 = scalar_select %p180, %s18, 1
      %p182 = scmp.lt.s32.totalorder %s19, 1
      %s183 = scalar_select %p182, %s19, 1
      %s184 = smul.addr %s183, 4
      %s185 = smul.addr %s181, 8
      %s186 = sadd.s32 %s184, %s185
      %s187 = smul.addr %s186, 4
      %s188 = scalar_lea.vmem %s3, %s187
      %p189 = scmp.lt.s32.totalorder %s18, 1
      %s190 = scalar_select %p189, %s18, 1
      %p191 = scmp.lt.s32.totalorder %s19, 1
      %s192 = scalar_select %p191, %s19, 1
      %s193 = smul.addr %s192, 10
      %s194 = smul.addr %s190, 20
      %s195 = sadd.s32 %s193, %s194
      %s196 = smul.addr %s195, 4
      %s197 = scalar_lea.vmem %s0, %s196
      %p198 = scmp.lt.s32.totalorder %s18, 1
      %s199 = scalar_select %p198, %s18, 1
      %p200 = scmp.lt.s32.totalorder %s19, 1
      %s201 = scalar_select %p200, %s19, 1
      %s202 = smul.addr %s201, 4
      %s203 = smul.addr %s199, 8
      %s204 = sadd.s32 %s202, %s203
      %s205 = smul.addr %s204, 4
      %s206 = scalar_lea.vmem %s3, %s205
      %v208 = vld [vmem:[%s197] sm:$0xf]
      %v209 = vld [vmem:[%s197 + $0x4] sm:$0x1]
      %v210 = vld [vmem:[%s197 + $0x8] sm:$0xf]
      %v211 = vld [vmem:[%s197 + $0xc] sm:$0x1]
      %v212 = vld [vmem:[%s197 + $0x10] sm:$0xf]
      %v213 = vld [vmem:[%s197 + $0x14] sm:$0x1]
      %v214 = vld [vmem:[%s197 + $0x18] sm:$0xf]
      %v215 = vld [vmem:[%s197 + $0x1c] sm:$0x1]
      %v216 = vld [vmem:[%s197 + $0x20] sm:$0xf]
      %v217 = vld [vmem:[%s197 + $0x24] sm:$0x1]
      %v226 = vunpack.c.l.b16 %v208
      %v227 = vunpack.c.l.b16 %v209
      %v228 = vunpack.c.l.b16 %v210
      %v229 = vunpack.c.l.b16 %v211
      %v230 = vunpack.c.l.b16 %v212
      %v231 = vunpack.c.l.b16 %v213
      %v232 = vunpack.c.l.b16 %v214
      %v233 = vunpack.c.l.b16 %v215
      %v234 = vpack.c.b16 %v227, %v226
      %v235 = vpack.c.b16 %v229, %v228
      %v236 = vpack.c.b16 %v231, %v230
      %v237 = vpack.c.b16 %v233, %v232
      %v239 = vshrl.u32 %v234, 16
      %v241 = vshll.u32 %v234, 16
      %v243 = vrot.slane %v241, 1
      %v244 = vor.u32 %v239, %v243
      %v246 = vshrl.u32 %v235, 16
      %v248 = vshll.u32 %v235, 16
      %v250 = vrot.slane %v248, 1
      %v251 = vor.u32 %v246, %v250
      %v253 = vshrl.u32 %v236, 16
      %v255 = vshll.u32 %v236, 16
      %v257 = vrot.slane %v255, 1
      %v258 = vor.u32 %v253, %v257
      %v260 = vshrl.u32 %v237, 16
      %v262 = vshll.u32 %v237, 16
      %v264 = vrot.slane %v262, 1
      %v265 = vor.u32 %v260, %v264
      %266 = vrot.lane.b32.xlu0 %v244, 16
      %v267 = vpop.permute.xlu0 %266
      %268 = vrot.lane.b32.xlu0 %v251, 16
      %v269 = vpop.permute.xlu0 %268
      %270 = vrot.lane.b32.xlu0 %v258, 16
      %v271 = vpop.permute.xlu0 %270
      %272 = vrot.lane.b32.xlu0 %v265, 16
      %v273 = vpop.permute.xlu0 %272
      %v275 = vunpack.c.l.b16 %v216
      %v276 = vpack.c.b16 %v228, %v228
      %v277 = vpack.c.b16 %v230, %v230
      %v278 = vpack.c.b16 %v232, %v232
      %v279 = vpack.c.b16 %v275, %v275
      %280 = vrot.lane.b32.xlu0 %v276, 32
      %v281 = vpop.permute.xlu0 %280
      %282 = vrot.lane.b32.xlu0 %v277, 32
      %v283 = vpop.permute.xlu0 %282
      %284 = vrot.lane.b32.xlu0 %v278, 32
      %v285 = vpop.permute.xlu0 %284
      %286 = vrot.lane.b32.xlu0 %v279, 32
      %v287 = vpop.permute.xlu0 %286
      %v289 = vunpack.c.l.b16 %v217
      %v290 = vpack.c.b16 %v289, %v275
      %v292 = vshrl.u32 %v290, 16
      %v294 = vshll.u32 %v290, 16
      %v296 = vrot.slane %v294, 1
      %v297 = vor.u32 %v292, %v296
      %298 = vrot.lane.b32.xlu0 %v251, 48
      %v299 = vpop.permute.xlu0 %298
      %300 = vrot.lane.b32.xlu0 %v258, 48
      %v301 = vpop.permute.xlu0 %300
      %302 = vrot.lane.b32.xlu0 %v265, 48
      %v303 = vpop.permute.xlu0 %302
      %304 = vrot.lane.b32.xlu0 %v297, 48
      %v305 = vpop.permute.xlu0 %304
      %vm306 = vcmask 130048
      %v309 = vsel %vm306, %v208, %v267
      %v312 = vsel %vm306, %v210, %v269
      %v315 = vsel %vm306, %v212, %v271
      %v318 = vsel %vm306, %v214, %v273
      %vm319 = vcmask 261120
      %v321 = vsel %vm319, %v309, %v281
      %v323 = vsel %vm319, %v312, %v283
      %v325 = vsel %vm319, %v315, %v285
      %v327 = vsel %vm319, %v318, %v287
      %vm328 = vcmask 392192
      %v330 = vsel %vm328, %v321, %v299
      %v332 = vsel %vm328, %v323, %v301
      %v334 = vsel %vm328, %v325, %v303
      %v336 = vsel %vm328, %v327, %v305
      %v337 = vld [vmem:[%s1] sm:$0xf]
      %v338 = vld [vmem:[%s1 + $0x4] sm:$0xf]
      %v339 = vld [vmem:[%s1 + $0x8] sm:$0xf]
      %v340 = vld [vmem:[%s1 + $0xc] sm:$0xf]
      %v341 = vld [vmem:[%s1 + $0x10] sm:$0xf]
      %v342 = vld [vmem:[%s1 + $0x14] sm:$0xf]
      %v343 = vld [vmem:[%s1 + $0x18] sm:$0xf]
      %v344 = vld [vmem:[%s1 + $0x1c] sm:$0xf]
      %v345 = vld [vmem:[%s2] sm:$0x1]
      %v347 = vlaneseq
      %v348 = vshrl.u32 %v347, 7
      %v349 = vsub.s32 0, %v348
      %v350 = vrot.slane %v345, %v349
      %v356 = vunpack.c.l.b16 %v330
      %v357 = vunpack.c.l.b16 %v332
      %v358 = vunpack.c.l.b16 %v334
      %v359 = vunpack.c.l.b16 %v336
      %v360 = vpack.c.b16 %v357, %v356
      %v361 = vpack.c.b16 %v359, %v358
      %v370 = vunpack.c.l.b16 %v337
      %v371 = vunpack.c.l.b16 %v338
      %v372 = vunpack.c.l.b16 %v339
      %v373 = vunpack.c.l.b16 %v340
      %v374 = vunpack.c.l.b16 %v341
      %v375 = vunpack.c.l.b16 %v342
      %v376 = vunpack.c.l.b16 %v343
      %v377 = vunpack.c.l.b16 %v344
      %v378 = vpack.c.b16 %v371, %v370
      %v379 = vpack.c.b16 %v373, %v372
      %v380 = vpack.c.b16 %v375, %v374
      %v381 = vpack.c.b16 %v377, %v376
      %vm386 = vcmask 523264
      %v388 = vsel %vm386, %v360, 0
      %v391 = vsel %vm386, %v361, 0
      %393 = vmatprep.subr.bf16.mxu0 0
      %394 = vmatpush1.bf16.msra.mxu0 0
      %395 = vmatprep.subr.bf16.mxu0 0
      %396 = vmatpush1.bf16.msra.mxu0 0
      %397 = vmatprep.subr.bf16.mxu0 0
      %398 = vmatpush1.bf16.msra.mxu0 0
      %399 = vmatprep.subr.bf16.mxu0 0
      %400 = vmatpush1.bf16.msra.mxu0 0
      %401 = vmatprep.subr.bf16.mxu0 0
      %402 = vmatpush1.bf16.msra.mxu0 %v381
      %403 = vmatprep.subr.bf16.mxu0 0
      %404 = vmatpush1.bf16.msra.mxu0 %v380
      %405 = vmatprep.subr.bf16.mxu0 0
      %406 = vmatpush1.bf16.msra.mxu0 %v379
      %407 = vmatprep.subr.bf16.mxu0 0
      %408 = vmatpush1.bf16.msra.mxu0 %v378
      %409 = vmatprep.subr.bf16.mxu0 0
      %410 = vmatpush2.bf16.msra.mxu0 0
      %411 = vmatprep.subr.bf16.mxu0 0
      %412 = vmatpush2.bf16.msra.mxu0 0
      %413 = vmatprep.subr.bf16.mxu0 0
      %414 = vmatpush2.bf16.msra.mxu0 0
      %415 = vmatprep.subr.bf16.mxu0 0
      %416 = vmatpush2.bf16.msra.mxu0 0
      %417 = vmatprep.subr.bf16.mxu0 0
      %418 = vmatpush2.bf16.msra.mxu0 0
      %419 = vmatprep.subr.bf16.mxu0 0
      %420 = vmatpush2.bf16.msra.mxu0 0
      %421 = vmatprep.subr.bf16.mxu0 0
      %422 = vmatpush2.bf16.msra.mxu0 0
      %423 = vmatprep.subr.bf16.mxu0 0
      %424 = vmatpush2.bf16.msra.mxu0 0
      %425 = vmatprep.mubr.bf16.mxu0 0
      %426 = vmatmul.mubr.bf16.gmra.mxu0 %v388
      %v427 = vpop.f32.mrf.mxu0
      %v428 = vadd.f32 %v350, %v427
      %v429 = vpop.f32.mrf.mxu0
      %v430 = vpop.f32.mrf.mxu0
      %v431 = vadd.f32 %v350, %v430
      %v432 = vpop.f32.mrf.mxu0
      %433 = vmatprep.mubr.bf16.mxu0 0
      %434 = vmatmul.mubr.bf16.gmra.mxu0 %v391
      %v435 = vpop.f32.mrf.mxu0
      %v436 = vadd.f32 %v350, %v435
      %v437 = vpop.f32.mrf.mxu0
      %v438 = vpop.f32.mrf.mxu0
      %v439 = vadd.f32 %v350, %v438
      %v440 = vpop.f32.mrf.mxu0
      %441 = vdwg.mxu0
      %v442 = vmax.f32 %v428, 0.0
      %v443 = vmax.f32 %v431, 0.0
      %v444 = vmax.f32 %v436, 0.0
      %v445 = vmax.f32 %v439, 0.0
      %v446 = vpack.c.bf16 %v443, %v442
      %v447 = vpack.c.bf16 %v445, %v444
      %v450 = vunpack.c.l.b16 %v446
      %v451 = vunpack.c.h.b16 %v446
      %v452 = vunpack.c.l.b16 %v447
      %v453 = vunpack.c.h.b16 %v447
      %v454 = vpack.c.b16 %v450, %v450
      %v455 = vpack.c.b16 %v451, %v451
      %v456 = vpack.c.b16 %v452, %v452
      %v457 = vpack.c.b16 %v453, %v453
      %462 = vst [vmem:[%s206] sm:$0xf] %v454
      %463 = vst [vmem:[%s206 + $0x4] sm:$0xf] %v455
      %464 = vst [vmem:[%s206 + $0x8] sm:$0xf] %v456
      %465 = vst [vmem:[%s206 + $0xc] sm:$0xf] %v457
      %p466 = scmp.lt.s32.totalorder %s18, 1
      %s467 = scalar_select %p466, %s18, 1
      %p468 = scmp.lt.s32.totalorder %s19, 1
      %s469 = scalar_select %p468, %s19, 1
      %s470 = smul.addr %s469, 4
      %s471 = smul.addr %s467, 8
      %s472 = sadd.s32 %s470, %s471
      %s473 = smul.addr %s472, 4
      %s474 = scalar_lea.vmem %s3, %s473
      // Predicated region
      $region33: #{convolution_block.1} parent=31 // pred_check
        %p475 = pneg %p116
      $region34: #{convolution_block.1} parent=31 // pred_check_branch
        %477 = sbr.rel (%p475) target = $region36
      $region35: #{convolution_block.1} parent=31 // pred_region
        _
      $region36: #{convolution_block.1} parent=31 // pred_fallthru
        _
    $region32: #{convolution_block.1} parent=5 // pred_fallthru
      _
    %p478 = scmp.le.s32.totalorder 2, %s9
    // Predicated region
    $region37: #{convolution_block.1} parent=5 // pred_check
      %p479 = pneg %p478
    $region38: #{convolution_block.1} parent=5 // pred_check_branch
      %481 = sbr.rel (%p479) target = $region40
    $region39: #{convolution_block.1} parent=5 // pred_region
      %s482 = ssub.s32 %s9, 2
      // Predicated region
      $region41: #{convolution_block.1} parent=39 // pred_check
        %p483 = pneg %p122
      $region42: #{convolution_block.1} parent=39 // pred_check_branch
        %485 = sbr.rel (%p483) target = $region44
      $region43: #{convolution_block.1} parent=39 // pred_region
        %p486 = scmp.lt.s32.totalorder %s20, 1
        %s487 = scalar_select %p486, %s20, 1
        %p488 = scmp.lt.s32.totalorder %s21, 1
        %s489 = scalar_select %p488, %s21, 1
        %s490 = smul.addr %s489, 4
        %s491 = smul.addr %s487, 8
        %s492 = sadd.s32 %s490, %s491
        %s493 = smul.addr %s492, 4
        %s494 = scalar_lea.vmem %s3, %s493
      $region44: #{convolution_block.1} parent=39 // pred_fallthru
        _
    $region40: #{convolution_block.1} parent=5 // pred_fallthru
      _
  $region6: #{convolution_block.1} parent=0 // loop_footer
    %s13 = sadd.s32 1, %s9
  $region7: #{convolution_block.1} parent=0 // loop_footer_branch
    %8 = sbr.rel target = $region3
  $region8: #{convolution_block.1} parent=0 // loop_exit
    _

</llo_original>
